<compile_context>
chip_gen: v5e
topology: v5e:2x2
jax: 0.10.0
libtpu: 0.0.40
codegen_flags: <defaults>
</compile_context>

<pallas_src>
import math
import functools

import jax
import jax.numpy as jnp
from jax.experimental import pallas as pl
from jax.experimental.pallas import tpu as pltpu


def _round_up(x, m):
    return ((x + m - 1) // m) * m


def swiglu_ffn_kernel(x_ref, w1_ref, w2_ref, w3_ref, o_ref, acc_ref):
    """One (M-tile, inner-tile) grid step of the SwiGLU FFN.

    x_ref : (tm, dim)    VMEM  activation tile (constant along the inner axis)
    w1_ref: (dim, tn)    VMEM  column tile of linear1 weight (transposed)
    w2_ref: (dim, tn)    VMEM  column tile of linear2 weight (transposed)
    w3_ref: (tn, dim)    VMEM  row tile of linear3 weight (transposed)
    o_ref : (tm, dim)    VMEM  output tile (resident across the inner axis)
    acc_ref:(tm, dim)    VMEM  float32 accumulator scratch
    """
    k = pl.program_id(1)

    @pl.when(k == 0)
    def _():
        acc_ref[...] = jnp.zeros_like(acc_ref)

    x = x_ref[...]
    # hidden_states_1 = linear1(x)[:, tile];  hidden_states_2 = linear2(x)[:, tile]
    h1 = jnp.dot(x, w1_ref[...], preferred_element_type=jnp.float32)
    h2 = jnp.dot(x, w2_ref[...], preferred_element_type=jnp.float32)
    # silu_multiply: F.silu(h1) * h2   (silu(x) = x * sigmoid(x))
    g = (h1 * jax.nn.sigmoid(h1)) * h2
    # dropout(p=0.0) is identity.
    # linear3: accumulate this inner-tile's contribution in f32.
    acc_ref[...] += jnp.dot(
        g.astype(x_ref.dtype), w3_ref[...], preferred_element_type=jnp.float32
    )

    @pl.when(k == pl.num_programs(1) - 1)
    def _():
        o_ref[...] = acc_ref[...].astype(o_ref.dtype)


def prepare_weights(w1, w2, w3, *, tn_max=512):
    """One-time weight prep (keep this OUT of the per-step path).

    w1, w2: [inner, dim], w3: [dim, inner]  (PyTorch nn.Linear layout)
    Returns ([dim, inner_pad], [dim, inner_pad], [inner_pad, dim], tn) where
    inner_pad is a multiple of the inner tile tn (zero-padded -> contributes 0).
    """
    assert tn_max % 128 == 0
    inner, dim = w1.shape
    tn = min(tn_max, _round_up(inner, 128))
    inner_pad = _round_up(inner, tn)
    pad = inner_pad - inner
    w1t = jnp.pad(w1.T, ((0, 0), (0, pad)))  # [dim, inner_pad]
    w2t = jnp.pad(w2.T, ((0, 0), (0, pad)))  # [dim, inner_pad]
    w3t = jnp.pad(w3.T, ((0, pad), (0, 0)))  # [inner_pad, dim]
    return w1t, w2t, w3t, tn


@functools.partial(jax.jit, static_argnames=("tn", "tm_max"))
def swiglu_ffn(x, w1t, w2t, w3t, *, tn, tm_max=256):
    """x: [batch, seq, dim]; w1t/w2t: [dim, inner_pad]; w3t: [inner_pad, dim]."""
    b, s, dim = x.shape
    inner_pad = w1t.shape[1]
    assert inner_pad % tn == 0
    assert tm_max % 8 == 0

    m = b * s
    tm = min(tm_max, _round_up(m, 8))
    m_pad = _round_up(m, tm)

    x2d = x.reshape(m, dim)
    if m_pad != m:
        x2d = jnp.pad(x2d, ((0, m_pad - m), (0, 0)))

    grid = (m_pad // tm, inner_pad // tn)

    # VMEM budget: double-buffered input/output tiles + f32 accumulator.
    act_bytes = jnp.dtype(x.dtype).itemsize
    w_bytes = jnp.dtype(w1t.dtype).itemsize
    vmem_est = (
        2 * tm * dim * act_bytes          # x tile (double-buffered)
        + 2 * 2 * dim * tn * w_bytes      # W1t, W2t tiles (double-buffered)
        + 2 * tn * dim * w_bytes          # W3t tile (double-buffered)
        + 2 * tm * dim * act_bytes        # output tile (double-buffered)
        + tm * dim * 4                    # f32 accumulator scratch
    )
    vmem_limit = max(32 * 1024 * 1024, min(128 * 1024 * 1024, int(vmem_est * 3 // 2)))

    out2d = pl.pallas_call(
        swiglu_ffn_kernel,
        out_shape=jax.ShapeDtypeStruct((m_pad, dim), x.dtype),
        grid_spec=pltpu.PrefetchScalarGridSpec(
            num_scalar_prefetch=0,
            grid=grid,
            in_specs=[
                pl.BlockSpec((tm, dim), lambda i, k: (i, 0)),   # x tile
                pl.BlockSpec((dim, tn), lambda i, k: (0, k)),   # W1^T column tile
                pl.BlockSpec((dim, tn), lambda i, k: (0, k)),   # W2^T column tile
                pl.BlockSpec((tn, dim), lambda i, k: (k, 0)),   # W3^T row tile
            ],
            out_specs=pl.BlockSpec((tm, dim), lambda i, k: (i, 0)),
            scratch_shapes=[pltpu.VMEM((tm, dim), jnp.float32)],
        ),
        compiler_params=pltpu.CompilerParams(
            dimension_semantics=("parallel", "arbitrary"),
            vmem_limit_bytes=vmem_limit,
        ),
    )(x2d, w1t, w2t, w3t)

    return out2d[:m].reshape(b, s, dim)


def kaiming_normal_fan_out(key, out_features, in_features, dtype=jnp.float32):
    """nn.init.kaiming_normal_(w, mode='fan_out', nonlinearity='relu') for a
    Linear weight of shape [out_features, in_features]: std = sqrt(2 / fan_out)."""
    std = math.sqrt(2.0 / out_features)
    return std * jax.random.normal(key, (out_features, in_features), dtype=dtype)


def swiglu_ref(x, w1, w2, w3):
    """Pure-JAX reference matching the PyTorch forward."""
    h1 = x @ w1.T
    h2 = x @ w2.T
    h = (h1 * jax.nn.sigmoid(h1)) * h2
    return h @ w3.T


if __name__ == "__main__":
    key = jax.random.PRNGKey(0)

    # ---- Case 1: small shapes consistent with the module (dim=32, mult=4) ----
    batch, seq, dim = 2, 8, 32
    inner_dim = int(dim * 4.0)  # 128

    kx, k1, k2, k3, kx2, k4, k5, k6 = jax.random.split(key, 8)
    x = jax.random.normal(kx, (batch, seq, dim), dtype=jnp.float32)
    w1 = kaiming_normal_fan_out(k1, inner_dim, dim)   # linear1.weight [inner, dim]
    w2 = kaiming_normal_fan_out(k2, inner_dim, dim)   # linear2.weight [inner, dim]
    w3 = kaiming_normal_fan_out(k3, dim, inner_dim)   # linear3.weight [dim, inner]

    w1t, w2t, w3t, tn = prepare_weights(w1, w2, w3)
    out = swiglu_ffn(x, w1t, w2t, w3t, tn=tn)
    out = jax.block_until_ready(out)
    ref = swiglu_ref(x, w1, w2, w3)
    assert out.shape == (batch, seq, dim)
    assert jnp.allclose(out, ref, atol=1e-4, rtol=1e-4), "mismatch vs reference (case 1)"

    # ---- Case 2: exercises inner-axis streaming/accumulation (>1 k-step) and
    # a token count that is not a multiple of a large tile.
    batch2, seq2, dim2 = 2, 20, 128
    inner2 = int(dim2 * 4.0)  # 512
    x2 = jax.random.normal(kx2, (batch2, seq2, dim2), dtype=jnp.float32)
    w1b = kaiming_normal_fan_out(k4, inner2, dim2)
    w2b = kaiming_normal_fan_out(k5, inner2, dim2)
    w3b = kaiming_normal_fan_out(k6, dim2, inner2)

    w1bt, w2bt, w3bt, tn2 = prepare_weights(w1b, w2b, w3b, tn_max=256)  # 2 inner tiles
    out2 = swiglu_ffn(x2, w1bt, w2bt, w3bt, tn=tn2)
    out2 = jax.block_until_ready(out2)
    ref2 = swiglu_ref(x2, w1b, w2b, w3b)
    assert out2.shape == (batch2, seq2, dim2)
    assert jnp.allclose(out2, ref2, atol=1e-4, rtol=1e-4), "mismatch vs reference (case 2)"

    print("KERNEL_OK")
</pallas_src>

<mosaic_0001>
module attributes {stable_mosaic.version = 11 : i64} {
  func.func @swiglu_ffn_kernel(%arg0: i32, %arg1: i32, %arg2: memref<16x32xf32, #tpu.memory_space<vmem>>, %arg3: memref<32x128xf32, #tpu.memory_space<vmem>>, %arg4: memref<32x128xf32, #tpu.memory_space<vmem>>, %arg5: memref<128x32xf32, #tpu.memory_space<vmem>>, %arg6: memref<16x32xf32, #tpu.memory_space<vmem>>, %arg7: memref<16x32xf32, #tpu.memory_space<vmem>>) attributes {dimension_semantics = [#tpu.dimension_semantics<parallel>, #tpu.dimension_semantics<arbitrary>], iteration_bounds = array<i64: 1, 1>, scalar_prefetch = 0 : i64, scratch_operands = 1 : i64, tpu.core_type = #tpu.core_type<tc>, window_params = [{transform_indices = @transform_0, window_bounds = array<i64: 16, 32>}, {transform_indices = @transform_1, window_bounds = array<i64: 32, 128>}, {transform_indices = @transform_2, window_bounds = array<i64: 32, 128>}, {transform_indices = @transform_3, window_bounds = array<i64: 128, 32>}, {transform_indices = @transform_4, window_bounds = array<i64: 16, 32>}]} {
    %c0_i32 = arith.constant 0 : i32
    %0 = arith.cmpi eq, %arg1, %c0_i32 : i32
    %1 = arith.extui %0 : i1 to i32
    %c0_i32_0 = arith.constant 0 : i32
    %2 = arith.cmpi ne, %1, %c0_i32_0 : i32
    scf.if %2 {
      %cst_17 = arith.constant 0.000000e+00 : f32
      %23 = vector.broadcast %cst_17 : f32 to vector<16x32xf32>
      %c0_18 = arith.constant 0 : index
      %c0_19 = arith.constant 0 : index
      %24 = vector.load %arg7[%c0_18, %c0_19] : memref<16x32xf32, #tpu.memory_space<vmem>>, vector<16x32xf32>
      tpu.vector_store %arg7[%c0_18, %c0_19], %23 {strides = array<i32>} : memref<16x32xf32, #tpu.memory_space<vmem>>, vector<16x32xf32>,
    } else {
    }
    %c0 = arith.constant 0 : index
    %c0_1 = arith.constant 0 : index
    %3 = vector.load %arg2[%c0, %c0_1] : memref<16x32xf32, #tpu.memory_space<vmem>>, vector<16x32xf32>
    %c0_2 = arith.constant 0 : index
    %c0_3 = arith.constant 0 : index
    %4 = vector.load %arg3[%c0_2, %c0_3] : memref<32x128xf32, #tpu.memory_space<vmem>>, vector<32x128xf32>
    %cst = arith.constant dense<0.000000e+00> : vector<16x128xf32>
    %5 = tpu.matmul %3, %4, %cst {dimension_numbers = #tpu.dot_dimension_numbers<[1], [0], [0], [1], [0, 0, 1, 1], [], []>} : vector<16x32xf32>, vector<32x128xf32>, vector<16x128xf32> -> vector<16x128xf32>
    %c0_4 = arith.constant 0 : index
    %c0_5 = arith.constant 0 : index
    %6 = vector.load %arg4[%c0_4, %c0_5] : memref<32x128xf32, #tpu.memory_space<vmem>>, vector<32x128xf32>
    %cst_6 = arith.constant dense<0.000000e+00> : vector<16x128xf32>
    %7 = tpu.matmul %3, %6, %cst_6 {dimension_numbers = #tpu.dot_dimension_numbers<[1], [0], [0], [1], [0, 0, 1, 1], [], []>} : vector<16x32xf32>, vector<32x128xf32>, vector<16x128xf32> -> vector<16x128xf32>
    %8 = arith.negf %5 : vector<16x128xf32>
    %9 = math.exp %8 : vector<16x128xf32>
    %cst_7 = arith.constant 1.000000e+00 : f32
    %10 = vector.broadcast %cst_7 : f32 to vector<16x128xf32>
    %11 = arith.addf %10, %9 : vector<16x128xf32>
    %12 = arith.divf %10, %11 : vector<16x128xf32>
    %13 = arith.mulf %5, %12 : vector<16x128xf32>
    %14 = arith.mulf %13, %7 : vector<16x128xf32>
    %c0_8 = arith.constant 0 : index
    %c0_9 = arith.constant 0 : index
    %15 = vector.load %arg7[%c0_8, %c0_9] : memref<16x32xf32, #tpu.memory_space<vmem>>, vector<16x32xf32>
    %c0_10 = arith.constant 0 : index
    %c0_11 = arith.constant 0 : index
    %16 = vector.load %arg5[%c0_10, %c0_11] : memref<128x32xf32, #tpu.memory_space<vmem>>, vector<128x32xf32>
    %cst_12 = arith.constant dense<0.000000e+00> : vector<16x32xf32>
    %17 = tpu.matmul %14, %16, %cst_12 {dimension_numbers = #tpu.dot_dimension_numbers<[1], [0], [0], [1], [0, 0, 1, 1], [], []>} : vector<16x128xf32>, vector<128x32xf32>, vector<16x32xf32> -> vector<16x32xf32>
    %18 = arith.addf %15, %17 : vector<16x32xf32>
    %c0_13 = arith.constant 0 : index
    %c0_14 = arith.constant 0 : index
    %19 = vector.load %arg7[%c0_13, %c0_14] : memref<16x32xf32, #tpu.memory_space<vmem>>, vector<16x32xf32>
    tpu.vector_store %arg7[%c0_13, %c0_14], %18 {strides = array<i32>} : memref<16x32xf32, #tpu.memory_space<vmem>>, vector<16x32xf32>,
    %c0_i32_15 = arith.constant 0 : i32
    %20 = arith.cmpi eq, %arg1, %c0_i32_15 : i32
    %21 = arith.extui %20 : i1 to i32
    %c0_i32_16 = arith.constant 0 : i32
    %22 = arith.cmpi ne, %21, %c0_i32_16 : i32
    scf.if %22 {
      %c0_17 = arith.constant 0 : index
      %c0_18 = arith.constant 0 : index
      %23 = vector.load %arg7[%c0_17, %c0_18] : memref<16x32xf32, #tpu.memory_space<vmem>>, vector<16x32xf32>
      %c0_19 = arith.constant 0 : index
      %c0_20 = arith.constant 0 : index
      %24 = vector.load %arg6[%c0_19, %c0_20] : memref<16x32xf32, #tpu.memory_space<vmem>>, vector<16x32xf32>
      tpu.vector_store %arg6[%c0_19, %c0_20], %23 {strides = array<i32>} : memref<16x32xf32, #tpu.memory_space<vmem>>, vector<16x32xf32>,
    } else {
    }
    return
  }
  func.func @transform_0(%arg0: i32, %arg1: i32) -> (i32, i32) {
    %c0_i32 = arith.constant 0 : i32
    %c0_i32_0 = arith.constant 0 : i32
    return %arg0, %c0_i32 : i32, i32
  }
  func.func @transform_1(%arg0: i32, %arg1: i32) -> (i32, i32) {
    %c0_i32 = arith.constant 0 : i32
    %c0_i32_0 = arith.constant 0 : i32
    return %c0_i32, %arg1 : i32, i32
  }
  func.func @transform_2(%arg0: i32, %arg1: i32) -> (i32, i32) {
    %c0_i32 = arith.constant 0 : i32
    %c0_i32_0 = arith.constant 0 : i32
    return %c0_i32, %arg1 : i32, i32
  }
  func.func @transform_3(%arg0: i32, %arg1: i32) -> (i32, i32) {
    %c0_i32 = arith.constant 0 : i32
    %c0_i32_0 = arith.constant 0 : i32
    return %arg1, %c0_i32 : i32, i32
  }
  func.func @transform_4(%arg0: i32, %arg1: i32) -> (i32, i32) {
    %c0_i32 = arith.constant 0 : i32
    %c0_i32_0 = arith.constant 0 : i32
    return %arg0, %c0_i32 : i32, i32
  }
}

</mosaic_0001>

<llo_original>
// kernel: swiglu_ffn.1
$region0: #{swiglu_ffn.1}
  #allocation0 [shape = 'u32[]', space=smem, size = 0x4, offset = 0x4, fixed_abs, tag = 'smem constant byte address 0x4 - core index']
  #allocation1 [shape = 'u32[72,128]{1,0:T(1,128)}', space=vmem, size = 0x9000, scoped, tag = 'internal scratch']
  #allocation2 [shape = 'f32[16,32]{1,0:T(8,128)}', space=vmem, size = 0x2000, scoped, tag = 'scratch operand']
  %s0 = inlined_call_operand.vmem [shape: f32[16,32], index: 0, kind: input, shape index: {}]
  %s1 = inlined_call_operand.vmem [shape: f32[32,128], index: 1, kind: input, shape index: {}]
  %s2 = inlined_call_operand.vmem [shape: f32[32,128], index: 2, kind: input, shape index: {}]
  %s3 = inlined_call_operand.vmem [shape: f32[128,32], index: 3, kind: input, shape index: {}]
  %s4 = inlined_call_operand.hbm [shape: f32[16,32], index: 4, kind: output, shape index: {}]
  %s5 = sld [smem:[#allocation0]]
  $region34: #{swiglu_ffn.1} parent=0
    _
  %s7 = ssub.s32 1, %s5
  %s8 = scalar_select 0, %s7, %s5
  $region1: #{swiglu_ffn.1} parent=0
    #allocation3 [shape = 'u8[8192]{0}', space=vmem, size = 0x2000, scoped, tag = 'output window, operand 0, single buffered']
    #allocation4 [shape = 's32[1]{0}', space=sflag, size = 0x4, scoped, tag = 'scoped memory for swiglu_ffn.1']
    %9 = vsyncpa [#allocation4], 0
    // Predicated region
    $region2: #{swiglu_ffn.1} parent=1 // pred_check
      _
    $region3: #{swiglu_ffn.1} parent=1 // pred_check_branch
      %11 = sbr.rel (0) target = $region5
    $region4: #{swiglu_ffn.1} parent=1 // pred_region
      _
    $region5: #{swiglu_ffn.1} parent=1 // pred_fallthru
      _
    // Predicated region
    $region6: #{swiglu_ffn.1} parent=1 // pred_check
      _
    $region7: #{swiglu_ffn.1} parent=1 // pred_check_branch
      %13 = sbr.rel (0) target = $region9
    $region8: #{swiglu_ffn.1} parent=1 // pred_region
      _
    $region9: #{swiglu_ffn.1} parent=1 // pred_fallthru
      _
    // Predicated region
    $region10: #{swiglu_ffn.1} parent=1 // pred_check
      _
    $region11: #{swiglu_ffn.1} parent=1 // pred_check_branch
      %15 = sbr.rel (0) target = $region13
    $region12: #{swiglu_ffn.1} parent=1 // pred_region
      _
    $region13: #{swiglu_ffn.1} parent=1 // pred_fallthru
      _
    // Predicated region
    $region14: #{swiglu_ffn.1} parent=1 // pred_check
      _
    $region15: #{swiglu_ffn.1} parent=1 // pred_check_branch
      %17 = sbr.rel (0) target = $region17
    $region16: #{swiglu_ffn.1} parent=1 // pred_region
      _
    $region17: #{swiglu_ffn.1} parent=1 // pred_fallthru
      _
    %p18 = scmp.eq.s32.totalorder 0, 0
    // Predicated region
    $region18: #{swiglu_ffn.1} parent=1 // pred_check
      %p19 = pneg %p18
    $region19: #{swiglu_ffn.1} parent=1 // pred_check_branch
      %21 = sbr.rel (%p19) target = $region21
    $region20: #{swiglu_ffn.1} parent=1 // pred_region
      %vm22 = vcmask 261120
      %23 = vst.msk [vmem:[#allocation2] sm:$0xff] %vm22, 0.0
      %24 = vst.msk [vmem:[#allocation2 + $0x8] sm:$0xff] %vm22, 0.0
    $region21: #{swiglu_ffn.1} parent=1 // pred_fallthru
      _
    %v25 = vld [vmem:[%s0] sm:$0xff]
    %v26 = vld [vmem:[%s0 + $0x8] sm:$0xff]
    %v27 = vld [vmem:[%s1] sm:$0xff]
    %v28 = vld [vmem:[%s1 + $0x8] sm:$0xff]
    %v29 = vld [vmem:[%s1 + $0x10] sm:$0xff]
    %v30 = vld [vmem:[%s1 + $0x18] sm:$0xff]
    %vm31 = vcmask 261120
    %v33 = vsel %vm31, %v25, 0
    %v36 = vsel %vm31, %v26, 0
    %38 = vmatpush.msra.mxu0 0.0
    %39 = vmatpush.msra.mxu0 0.0
    %40 = vmatpush.msra.mxu0 0.0
    %41 = vmatpush.msra.mxu0 0.0
    %42 = vmatpush.msra.mxu0 0.0
    %43 = vmatpush.msra.mxu0 0.0
    %44 = vmatpush.msra.mxu0 0.0
    %45 = vmatpush.msra.mxu0 0.0
    %46 = vmatpush.msra.mxu0 0.0
    %47 = vmatpush.msra.mxu0 0.0
    %48 = vmatpush.msra.mxu0 0.0
    %49 = vmatpush.msra.mxu0 0.0
    %50 = vmatpush.msra.mxu0 %v30
    %51 = vmatpush.msra.mxu0 %v29
    %52 = vmatpush.msra.mxu0 %v28
    %53 = vmatpush.msra.mxu0 %v27
    %54 = vmatmul.f32.gmra.mxu0 %v33
    %v55 = vpop.f32.mrf.mxu0
    %v56 = vadd.f32 0.0, %v55
    %57 = vmatmul.f32.gmra.mxu0 %v36
    %v58 = vpop.f32.mrf.mxu0
    %v59 = vadd.f32 0.0, %v58
    %60 = vdwg.mxu0
    %v61 = vld [vmem:[%s2] sm:$0xff]
    %v62 = vld [vmem:[%s2 + $0x8] sm:$0xff]
    %v63 = vld [vmem:[%s2 + $0x10] sm:$0xff]
    %v64 = vld [vmem:[%s2 + $0x18] sm:$0xff]
    %65 = vmatpush.msra.mxu0 0.0
    %66 = vmatpush.msra.mxu0 0.0
    %67 = vmatpush.msra.mxu0 0.0
    %68 = vmatpush.msra.mxu0 0.0
    %69 = vmatpush.msra.mxu0 0.0
    %70 = vmatpush.msra.mxu0 0.0
    %71 = vmatpush.msra.mxu0 0.0
    %72 = vmatpush.msra.mxu0 0.0
    %73 = vmatpush.msra.mxu0 0.0
    %74 = vmatpush.msra.mxu0 0.0
    %75 = vmatpush.msra.mxu0 0.0
    %76 = vmatpush.msra.mxu0 0.0
    %77 = vmatpush.msra.mxu0 %v64
    %78 = vmatpush.msra.mxu0 %v63
    %79 = vmatpush.msra.mxu0 %v62
    %80 = vmatpush.msra.mxu0 %v61
    %81 = vmatmul.f32.gmra.mxu0 %v33
    %v82 = vpop.f32.mrf.mxu0
    %v83 = vadd.f32 0.0, %v82
    %84 = vmatmul.f32.gmra.mxu0 %v36
    %v85 = vpop.f32.mrf.mxu0
    %v86 = vadd.f32 0.0, %v85
    %87 = vdwg.mxu0
    %v88 = vxor.u32 %v56, 2147483648
    %v89 = vxor.u32 %v59, 2147483648
    %v90 = vmul.f32 %v88, 1.442695
    %v91 = vpow.pop %v90
    %v92 = vmul.f32 %v89, 1.442695
    %v93 = vpow.pop %v92
    %v94 = vadd.f32 %v91, 1.0
    %v95 = vadd.f32 %v93, 1.0
    %v96 = vrcp.pop %v94
    %v97 = vmul.f32 %v94, %v96
    %v98 = vsub.f32 1.0, %v97
    %v99 = vmul.f32 %v96, %v98
    %v100 = vadd.f32 %v96, %v99
    %vm101 = vweird.f32 %v94
    %vm102 = vweird.f32 %v96
    %vm103 = vmor %vm101, %vm102
    %v104 = vsel %vm103, %v96, %v100
    %v105 = vand.u32 2147483647, %v94
    %vm106 = vcmp.eq.f32.partialorder %v105, 8.507059e+37
    %v107 = vand.u32 %v94, 2147483648
    %v108 = vor.u32 1.1754944e-38, %v107
    %v109 = vsel %vm106, %v108, %v104
    %v110 = vmul.f32 1.0, %v109
    %v111 = vrcp.pop %v95
    %v112 = vmul.f32 %v95, %v111
    %v113 = vsub.f32 1.0, %v112
    %v114 = vmul.f32 %v111, %v113
    %v115 = vadd.f32 %v111, %v114
    %vm116 = vweird.f32 %v95
    %vm117 = vweird.f32 %v111
    %vm118 = vmor %vm116, %vm117
    %v119 = vsel %vm118, %v111, %v115
    %v120 = vand.u32 2147483647, %v95
    %vm121 = vcmp.eq.f32.partialorder %v120, 8.507059e+37
    %v122 = vand.u32 %v95, 2147483648
    %v123 = vor.u32 1.1754944e-38, %v122
    %v124 = vsel %vm121, %v123, %v119
    %v125 = vmul.f32 1.0, %v124
    %v126 = vmul.f32 %v56, %v110
    %v127 = vmul.f32 %v59, %v125
    %v128 = vmul.f32 %v126, %v83
    %v129 = vmul.f32 %v127, %v86
    %v130 = vld [vmem:[#allocation2] sm:$0xff]
    %v131 = vld [vmem:[#allocation2 + $0x8] sm:$0xff]
    %v132 = vld [vmem:[%s3] sm:$0xff]
    %v133 = vld [vmem:[%s3 + $0x8] sm:$0xff]
    %v134 = vld [vmem:[%s3 + $0x10] sm:$0xff]
    %v135 = vld [vmem:[%s3 + $0x18] sm:$0xff]
    %v136 = vld [vmem:[%s3 + $0x20] sm:$0xff]
    %v137 = vld [vmem:[%s3 + $0x28] sm:$0xff]
    %v138 = vld [vmem:[%s3 + $0x30] sm:$0xff]
    %v139 = vld [vmem:[%s3 + $0x38] sm:$0xff]
    %v140 = vld [vmem:[%s3 + $0x40] sm:$0xff]
    %v141 = vld [vmem:[%s3 + $0x48] sm:$0xff]
    %v142 = vld [vmem:[%s3 + $0x50] sm:$0xff]
    %v143 = vld [vmem:[%s3 + $0x58] sm:$0xff]
    %v144 = vld [vmem:[%s3 + $0x60] sm:$0xff]
    %v145 = vld [vmem:[%s3 + $0x68] sm:$0xff]
    %v146 = vld [vmem:[%s3 + $0x70] sm:$0xff]
    %v147 = vld [vmem:[%s3 + $0x78] sm:$0xff]
    %148 = vmatpush.msra.mxu0 %v147
    %149 = vmatpush.msra.mxu0 %v146
    %150 = vmatpush.msra.mxu0 %v145
    %151 = vmatpush.msra.mxu0 %v144
    %152 = vmatpush.msra.mxu0 %v143
    %153 = vmatpush.msra.mxu0 %v142
    %154 = vmatpush.msra.mxu0 %v141
    %155 = vmatpush.msra.mxu0 %v140
    %156 = vmatpush.msra.mxu0 %v139
    %157 = vmatpush.msra.mxu0 %v138
    %158 = vmatpush.msra.mxu0 %v137
    %159 = vmatpush.msra.mxu0 %v136
    %160 = vmatpush.msra.mxu0 %v135
    %161 = vmatpush.msra.mxu0 %v134
    %162 = vmatpush.msra.mxu0 %v133
    %163 = vmatpush.msra.mxu0 %v132
    %164 = vmatmul.f32.gmra.mxu0 %v128
    %v165 = vpop.f32.mrf.mxu0
    %v166 = vadd.f32 0.0, %v165
    %167 = vmatmul.f32.gmra.mxu0 %v129
    %v168 = vpop.f32.mrf.mxu0
    %v169 = vadd.f32 0.0, %v168
    %170 = vdwg.mxu0
    %v171 = vadd.f32 %v130, %v166
    %v172 = vadd.f32 %v131, %v169
    %173 = vst.msk [vmem:[#allocation2] sm:$0xff] %vm31, %v171
    %174 = vst.msk [vmem:[#allocation2 + $0x8] sm:$0xff] %vm31, %v172
    // Predicated region
    $region22: #{swiglu_ffn.1} parent=1 // pred_check
      %p175 = pneg %p18
    $region23: #{swiglu_ffn.1} parent=1 // pred_check_branch
      %177 = sbr.rel (%p175) target = $region25
    $region24: #{swiglu_ffn.1} parent=1 // pred_region
      %v178 = vld [vmem:[#allocation2] sm:$0xff]
      %v179 = vld [vmem:[#allocation2 + $0x8] sm:$0xff]
      %180 = vst.msk [vmem:[#allocation3] sm:$0xff] %vm31, %v178
      %181 = vst.msk [vmem:[#allocation3 + $0x8] sm:$0xff] %vm31, %v179
    $region25: #{swiglu_ffn.1} parent=1 // pred_fallthru
      _
    // Predicated region
    $region26: #{swiglu_ffn.1} parent=1 // pred_check
      _
    $region27: #{swiglu_ffn.1} parent=1 // pred_check_branch
      %183 = sbr.rel (0) target = $region29
    $region28: #{swiglu_ffn.1} parent=1 // pred_region
      %185 = vsyncadd [#allocation4], 0
      %s186 = sshll.u32 [#allocation3], 4
      %s187 = int_to_ptr.vmem [resolvable:$true] %s186
      %s188 = sshll.u32 %s4, 4
      %s189 = int_to_ptr.hbm [resolvable:$true] %s188
      %194 = dma.vmem_to_hbm [thread:$0]  %s187, 256, %s189, [#allocation4], 128, 128, 8
    $region29: #{swiglu_ffn.1} parent=1 // pred_fallthru
      _
    // Predicated region
    $region30: #{swiglu_ffn.1} parent=1 // pred_check
      _
    $region31: #{swiglu_ffn.1} parent=1 // pred_check_branch
      %196 = sbr.rel (0) target = $region33
    $region32: #{swiglu_ffn.1} parent=1 // pred_region
      %198 = dma.done [#allocation4], 256
    $region33: #{swiglu_ffn.1} parent=1 // pred_fallthru
      _
    %199 = vsyncpa [#allocation4], 1

</llo_original>
